<compile_context>
chip_gen: v6e
topology: v6e:2x2x1
jax: 0.10.0
libtpu: 0.0.40
codegen_flags: <defaults>
</compile_context>

<pallas_src>
import functools

import jax
import jax.numpy as jnp
from jax.experimental import pallas as pl
from jax.experimental.pallas import tpu as pltpu

NEG_INF = -1e9   # large negative additive mask (stands in for the torch -INF fill)
LN_EPS = 1e-6    # custom LayerNorm eps


# ---------------------------------------------------------------------------
# Tiling / compiler-param helpers
# ---------------------------------------------------------------------------

def _row_tile(m, per_row_bytes, resident_bytes=0, budget=40 << 20):
    """Largest row tile dividing m that keeps double-buffered blocks within budget.

    Prefers 256+ row tiles (keeps the 2x256x256 MXU of v6e/v7x full); falls back to
    a single full block when m is not a multiple of 8 (always a legal block shape).
    """
    if m % 8 != 0:
        return m
    cap = max(8, (budget - 2 * resident_bytes) // max(2 * per_row_bytes, 1))
    for t in (512, 256, 128, 64, 32, 16, 8):
        if t <= cap and m % t == 0:
            return t
    return m


def _mosaic_params(sems, block_bytes):
    """CompilerParams with an explicit VMEM limit sized from the actual block footprint."""
    limit = int(2 * block_bytes + (4 << 20))          # double-buffering + headroom
    limit = max(16 << 20, min(limit, 64 << 20))       # stay within v7x's 64 MiB physical VMEM
    return pltpu.CompilerParams(dimension_semantics=sems, vmem_limit_bytes=limit)


# ---------------------------------------------------------------------------
# Kernels
# ---------------------------------------------------------------------------

def _linear_kernel(x_ref, w_ref, b_ref, o_ref):
    y = jnp.dot(x_ref[...], w_ref[...], preferred_element_type=jnp.float32) + b_ref[...]
    o_ref[...] = y.astype(o_ref.dtype)


def _attend_heads(q, k, v, bias, o_ref, *, num_heads, head_dim, scale):
    """Per-head attention; per-head (Sq, Sk) scores only, lane-dense (Sq, H*Dh) store."""
    for hh in range(num_heads):
        lo = hh * head_dim
        hi = lo + head_dim
        s = jnp.einsum("qd,kd->qk", q[:, lo:hi] * scale, k[:, lo:hi],
                       preferred_element_type=jnp.float32)
        s = s + bias
        m = jnp.max(s, axis=-1, keepdims=True)
        p = jnp.exp(s - m)
        l = jnp.sum(p, axis=-1, keepdims=True)
        o = jnp.einsum("qk,kd->qd", p, v[:, lo:hi], preferred_element_type=jnp.float32)
        o_ref[0, :, lo:hi] = (o * pl.reciprocal(l, approx=True)).astype(o_ref.dtype)


def _self_mha_kernel(pad_ref, qkv_ref, o_ref, *, num_heads, head_dim, scale):
    # One batch element per grid step.  qkv_ref: (1, S, 3D) fused projection.
    d = num_heads * head_dim
    x = qkv_ref[0].astype(jnp.float32)                       # (S, 3D)
    q, k, v = x[:, :d], x[:, d:2 * d], x[:, 2 * d:]
    s_len = x.shape[0]
    rows = jax.lax.broadcasted_iota(jnp.int32, (s_len, s_len), 0)
    cols = jax.lax.broadcasted_iota(jnp.int32, (s_len, s_len), 1)
    # key-padding (1, S) additive bias + mask_self diagonal, built in-kernel.
    bias = pad_ref[0] + jnp.where(rows == cols, NEG_INF, 0.0)
    _attend_heads(q, k, v, bias, o_ref,
                  num_heads=num_heads, head_dim=head_dim, scale=scale)


def _cross_mha_kernel(pad_ref, q_ref, kv_ref, o_ref, *, num_heads, head_dim, scale):
    # One batch element per grid step.  q_ref: (1, Sq, D); kv_ref: (1, Sk, 2D) fused.
    d = num_heads * head_dim
    q = q_ref[0].astype(jnp.float32)                         # (Sq, D)
    kv = kv_ref[0].astype(jnp.float32)                       # (Sk, 2D)
    k, v = kv[:, :d], kv[:, d:]
    bias = pad_ref[0]                                        # (1, Sk) key-padding bias
    _attend_heads(q, k, v, bias, o_ref,
                  num_heads=num_heads, head_dim=head_dim, scale=scale)


def _proj_add_ln_kernel(x_ref, w_ref, b_ref, res_ref, g_ref, beta_ref, o_ref, *, eps):
    # attention out-projection + residual add + custom LayerNorm (torch.std => ddof=1)
    y = jnp.dot(x_ref[...], w_ref[...], preferred_element_type=jnp.float32) + b_ref[...]
    y = y + res_ref[...].astype(jnp.float32)
    d = y.shape[-1]
    mean = jnp.mean(y, axis=-1, keepdims=True)
    diff = y - mean
    std = jnp.sqrt(jnp.sum(diff * diff, axis=-1, keepdims=True) / (d - 1))
    o_ref[...] = (g_ref[...] * diff / (std + eps) + beta_ref[...]).astype(o_ref.dtype)


def _ffn_add_ln_kernel(x_ref, w1_ref, b1_ref, w2_ref, b2_ref, g_ref, beta_ref, o_ref, *, eps):
    # relu(x@W1+b1)@W2+b2 + x (residual) + custom LayerNorm, all in one VMEM pass.
    x = x_ref[...].astype(jnp.float32)
    h = jnp.maximum(jnp.dot(x, w1_ref[...], preferred_element_type=jnp.float32)
                    + b1_ref[...], 0.0)
    y = jnp.dot(h, w2_ref[...], preferred_element_type=jnp.float32) + b2_ref[...] + x
    d = y.shape[-1]
    mean = jnp.mean(y, axis=-1, keepdims=True)
    diff = y - mean
    std = jnp.sqrt(jnp.sum(diff * diff, axis=-1, keepdims=True) / (d - 1))
    o_ref[...] = (g_ref[...] * diff / (std + eps) + beta_ref[...]).astype(o_ref.dtype)


# ---------------------------------------------------------------------------
# Pallas wrappers
# ---------------------------------------------------------------------------

def linear(x, w, b):
    m, k = x.shape
    n = w.shape[1]
    w_bytes = (k * n + n) * 4
    tm = _row_tile(m, per_row_bytes=(k + n) * 4, resident_bytes=w_bytes)
    block_bytes = tm * (k + n) * 4 + w_bytes
    return pl.pallas_call(
        _linear_kernel,
        out_shape=jax.ShapeDtypeStruct((m, n), x.dtype),
        grid_spec=pltpu.PrefetchScalarGridSpec(
            num_scalar_prefetch=0,
            grid=(m // tm,),
            in_specs=[
                pl.BlockSpec((tm, k), lambda i: (i, 0)),
                pl.BlockSpec((k, n), lambda i: (0, 0)),
                pl.BlockSpec((1, n), lambda i: (0, 0)),
            ],
            out_specs=pl.BlockSpec((tm, n), lambda i: (i, 0)),
        ),
        compiler_params=_mosaic_params(("parallel",), block_bytes),
    )(x, w, b.reshape(1, n))


def self_attention(qkv, pad_bias, num_heads, head_dim, scale):
    b, s, d3 = qkv.shape
    d = num_heads * head_dim
    block_bytes = (s * d3 + s * d + s) * 4 + 2 * s * s * 4
    return pl.pallas_call(
        functools.partial(_self_mha_kernel, num_heads=num_heads,
                          head_dim=head_dim, scale=scale),
        out_shape=jax.ShapeDtypeStruct((b, s, d), qkv.dtype),
        grid_spec=pltpu.PrefetchScalarGridSpec(
            num_scalar_prefetch=0,
            grid=(b,),
            in_specs=[
                pl.BlockSpec((1, 1, s), lambda i: (i, 0, 0)),
                pl.BlockSpec((1, s, d3), lambda i: (i, 0, 0)),
            ],
            out_specs=pl.BlockSpec((1, s, d), lambda i: (i, 0, 0)),
        ),
        compiler_params=_mosaic_params(("parallel",), block_bytes),
    )(pad_bias, qkv)


def cross_attention(q, kv, pad_bias, num_heads, head_dim, scale):
    b, sq, d = q.shape
    sk = kv.shape[1]
    block_bytes = (sq * d + sk * 2 * d + sq * d + sk) * 4 + 2 * sq * sk * 4
    return pl.pallas_call(
        functools.partial(_cross_mha_kernel, num_heads=num_heads,
                          head_dim=head_dim, scale=scale),
        out_shape=jax.ShapeDtypeStruct((b, sq, d), q.dtype),
        grid_spec=pltpu.PrefetchScalarGridSpec(
            num_scalar_prefetch=0,
            grid=(b,),
            in_specs=[
                pl.BlockSpec((1, 1, sk), lambda i: (i, 0, 0)),
                pl.BlockSpec((1, sq, d), lambda i: (i, 0, 0)),
                pl.BlockSpec((1, sk, 2 * d), lambda i: (i, 0, 0)),
            ],
            out_specs=pl.BlockSpec((1, sq, d), lambda i: (i, 0, 0)),
        ),
        compiler_params=_mosaic_params(("parallel",), block_bytes),
    )(pad_bias, q, kv)


def proj_add_layer_norm(x, w, b, res, gamma, beta, eps=LN_EPS):
    m, k = x.shape
    n = w.shape[1]
    w_bytes = (k * n + 3 * n) * 4
    tm = _row_tile(m, per_row_bytes=(k + 2 * n) * 4, resident_bytes=w_bytes)
    block_bytes = tm * (k + 2 * n) * 4 + w_bytes
    return pl.pallas_call(
        functools.partial(_proj_add_ln_kernel, eps=eps),
        out_shape=jax.ShapeDtypeStruct((m, n), res.dtype),
        grid_spec=pltpu.PrefetchScalarGridSpec(
            num_scalar_prefetch=0,
            grid=(m // tm,),
            in_specs=[
                pl.BlockSpec((tm, k), lambda i: (i, 0)),
                pl.BlockSpec((k, n), lambda i: (0, 0)),
                pl.BlockSpec((1, n), lambda i: (0, 0)),
                pl.BlockSpec((tm, n), lambda i: (i, 0)),
                pl.BlockSpec((1, n), lambda i: (0, 0)),
                pl.BlockSpec((1, n), lambda i: (0, 0)),
            ],
            out_specs=pl.BlockSpec((tm, n), lambda i: (i, 0)),
        ),
        compiler_params=_mosaic_params(("parallel",), block_bytes),
    )(x, w, b.reshape(1, n), res, gamma.reshape(1, n), beta.reshape(1, n))


def ffn_add_layer_norm(x, w1, b1, w2, b2, gamma, beta, eps=LN_EPS):
    m, d = x.shape
    hdim = w1.shape[1]
    w_bytes = (2 * d * hdim + hdim + 3 * d) * 4
    # TODO(synk): for very large hidden dims on v7x (64 MiB VMEM) tile hdim as an
    # 'arbitrary' reduction grid axis with an f32 accumulator instead of keeping both
    # FFN weights resident.
    tm = _row_tile(m, per_row_bytes=(2 * d + 2 * hdim) * 4, resident_bytes=w_bytes,
                   budget=32 << 20)
    block_bytes = tm * (2 * d + hdim) * 4 + w_bytes
    return pl.pallas_call(
        functools.partial(_ffn_add_ln_kernel, eps=eps),
        out_shape=jax.ShapeDtypeStruct((m, d), x.dtype),
        grid_spec=pltpu.PrefetchScalarGridSpec(
            num_scalar_prefetch=0,
            grid=(m // tm,),
            in_specs=[
                pl.BlockSpec((tm, d), lambda i: (i, 0)),
                pl.BlockSpec((d, hdim), lambda i: (0, 0)),
                pl.BlockSpec((1, hdim), lambda i: (0, 0)),
                pl.BlockSpec((hdim, d), lambda i: (0, 0)),
                pl.BlockSpec((1, d), lambda i: (0, 0)),
                pl.BlockSpec((1, d), lambda i: (0, 0)),
                pl.BlockSpec((1, d), lambda i: (0, 0)),
            ],
            out_specs=pl.BlockSpec((tm, d), lambda i: (i, 0)),
        ),
        compiler_params=_mosaic_params(("parallel",), block_bytes),
    )(x, w1, b1.reshape(1, hdim), w2, b2.reshape(1, d),
      gamma.reshape(1, d), beta.reshape(1, d))


# ---------------------------------------------------------------------------
# Wrapper-side plumbing (cheap jnp, not kernels)
# ---------------------------------------------------------------------------

def sinusoidal_encoding(length, dim, dtype):
    # TODO(synk): exact positional_encodings_like formula lives in the repo's utils;
    # standard interleaved sin/cos over the sequence axis is used here.
    positions = jnp.arange(length, dtype=jnp.float32)
    channels = jnp.arange(0, dim, 2, dtype=jnp.float32) / dim
    inv_freq = 1.0 / (10000.0 ** channels)
    ang = positions[:, None] * inv_freq[None, :]                 # (S, D/2)
    enc = jnp.stack([jnp.sin(ang), jnp.cos(ang)], axis=-1).reshape(length, dim)
    return enc.astype(dtype)


# ---------------------------------------------------------------------------
# ConditionATTLayer forward (Pallas)
# ---------------------------------------------------------------------------

def condition_att_layer(params, input_states, ctx_states, mask_input, mask_ctx, num_heads):
    s, b, d = input_states.shape
    sc = ctx_states.shape[0]
    h = num_heads
    dh = d // h
    scale = float(dh) ** -0.5

    # position_init=True: add positional encodings; positional=False: no pos_slf_attn.
    pos = sinusoidal_encoding(s, d, input_states.dtype)
    # One layout change (S,B,D)->(B,S,D); everything downstream stays batch-major flat,
    # so no per-head split/merge transposes are ever needed.
    x0 = (input_states + pos[:, None, :]).transpose(1, 0, 2)          # (B, S, D)
    ctx = ctx_states.transpose(1, 0, 2)                               # (B, Sc, D)
    x0_flat = x0.reshape(b * s, d)
    ctx_flat = ctx.reshape(b * sc, d)

    # Key-padding masks as tiny (B,1,S) additive biases; diagonal mask built in-kernel.
    pad_self = jnp.where(mask_input == 0, NEG_INF, 0.0).astype(jnp.float32).reshape(b, 1, s)
    pad_cross = jnp.where(mask_ctx == 0, NEG_INF, 0.0).astype(jnp.float32).reshape(b, 1, sc)

    # ---- SelfAttentionBlock (mask_self=True, mask_future=False, post-LN, residual) ----
    qkv = linear(x0_flat, params["self_wqkv"], params["self_bqkv"])           # (B*S, 3D)
    attn = self_attention(qkv.reshape(b, s, 3 * d), pad_self, h, dh, scale)   # (B, S, D)
    y1 = proj_add_layer_norm(attn.reshape(b * s, d), params["self_wo"], params["self_bo"],
                             x0_flat, params["ln1_g"], params["ln1_b"])

    # ---- InterAttentionBlock (cond_attn over ctx_states, post-LN, residual) ----
    q2 = linear(y1, params["cross_wq"], params["cross_bq"])                   # (B*S, D)
    kv2 = linear(ctx_flat, params["cross_wkv"], params["cross_bkv"])          # (B*Sc, 2D)
    attn2 = cross_attention(q2.reshape(b, s, d), kv2.reshape(b, sc, 2 * d),
                            pad_cross, h, dh, scale)                          # (B, S, D)
    y2 = proj_add_layer_norm(attn2.reshape(b * s, d), params["cross_wo"], params["cross_bo"],
                             y1, params["ln2_g"], params["ln2_b"])

    # ---- FeedForwardBlock (relu MLP + residual + post-LN); dropout = eval no-op ----
    y3 = ffn_add_layer_norm(y2, params["fc1_w"], params["fc1_b"],
                            params["fc2_w"], params["fc2_b"],
                            params["ln3_g"], params["ln3_b"])

    return y3.reshape(b, s, d).transpose(1, 0, 2)                             # (S, B, D)


# ---------------------------------------------------------------------------
# Pure-jnp reference (same math) for a correctness check
# ---------------------------------------------------------------------------

def condition_att_layer_reference(params, input_states, ctx_states, mask_input, mask_ctx,
                                  num_heads):
    s, b, d = input_states.shape
    sc = ctx_states.shape[0]
    h = num_heads
    dh = d // h
    scale = float(dh) ** -0.5

    def ln(x, g, bb, eps=LN_EPS):
        mean = x.mean(-1, keepdims=True)
        var = ((x - mean) ** 2).sum(-1, keepdims=True) / (x.shape[-1] - 1)
        return g * (x - mean) / (jnp.sqrt(var) + eps) + bb

    def attn(q, k, v, bias):
        B, Sq, D = q.shape
        Sk = k.shape[1]
        qh = q.reshape(B, Sq, h, dh).transpose(0, 2, 1, 3) * scale
        kh = k.reshape(B, Sk, h, dh).transpose(0, 2, 1, 3)
        vh = v.reshape(B, Sk, h, dh).transpose(0, 2, 1, 3)
        sco = jnp.einsum("bhqd,bhkd->bhqk", qh, kh) + bias[:, None]
        p = jax.nn.softmax(sco, axis=-1)
        o = jnp.einsum("bhqk,bhkd->bhqd", p, vh)
        return o.transpose(0, 2, 1, 3).reshape(B, Sq, D)

    pos = sinusoidal_encoding(s, d, input_states.dtype)
    x0 = (input_states + pos[:, None, :]).transpose(1, 0, 2)
    ctx = ctx_states.transpose(1, 0, 2)

    pad_self = jnp.where(mask_input == 0, NEG_INF, 0.0)[:, None, :]           # (B,1,S)
    diag = jnp.where(jnp.eye(s, dtype=bool), NEG_INF, 0.0)[None]              # (1,S,S)
    bias_self = pad_self + diag                                               # (B,S,S)
    bias_cross = jnp.where(mask_ctx == 0, NEG_INF, 0.0)[:, None, :]           # (B,1,Sc)

    qkv = x0 @ params["self_wqkv"] + params["self_bqkv"]
    q, k, v = jnp.split(qkv, 3, axis=-1)
    a = attn(q, k, v, bias_self) @ params["self_wo"] + params["self_bo"]
    y1 = ln(a + x0, params["ln1_g"], params["ln1_b"])

    q2 = y1 @ params["cross_wq"] + params["cross_bq"]
    kv2 = ctx @ params["cross_wkv"] + params["cross_bkv"]
    k2, v2 = jnp.split(kv2, 2, axis=-1)
    a2 = attn(q2, k2, v2, bias_cross) @ params["cross_wo"] + params["cross_bo"]
    y2 = ln(a2 + y1, params["ln2_g"], params["ln2_b"])

    hh = jnp.maximum(y2 @ params["fc1_w"] + params["fc1_b"], 0.0)
    f = hh @ params["fc2_w"] + params["fc2_b"]
    y3 = ln(f + y2, params["ln3_g"], params["ln3_b"])
    return y3.transpose(1, 0, 2)


# ---------------------------------------------------------------------------
# Parameter init + demo
# ---------------------------------------------------------------------------

def init_params(key, d_model, d_hidden):
    keys = jax.random.split(key, 8)

    def w(k, shape):
        return jax.random.normal(k, shape, dtype=jnp.float32) / (shape[0] ** 0.5)

    # NOTE: fused QKV / KV layouts assume fairseq in_proj ordering (Q|K|V contiguous).
    return {
        "self_wqkv": w(keys[0], (d_model, 3 * d_model)),
        "self_bqkv": jnp.zeros((3 * d_model,), jnp.float32),
        "self_wo": w(keys[1], (d_model, d_model)),
        "self_bo": jnp.zeros((d_model,), jnp.float32),
        "ln1_g": jnp.ones((d_model,), jnp.float32),
        "ln1_b": jnp.zeros((d_model,), jnp.float32),
        "cross_wq": w(keys[2], (d_model, d_model)),
        "cross_bq": jnp.zeros((d_model,), jnp.float32),
        "cross_wkv": w(keys[3], (d_model, 2 * d_model)),
        "cross_bkv": jnp.zeros((2 * d_model,), jnp.float32),
        "cross_wo": w(keys[4], (d_model, d_model)),
        "cross_bo": jnp.zeros((d_model,), jnp.float32),
        "ln2_g": jnp.ones((d_model,), jnp.float32),
        "ln2_b": jnp.zeros((d_model,), jnp.float32),
        "fc1_w": w(keys[5], (d_model, d_hidden)),
        "fc1_b": jnp.zeros((d_hidden,), jnp.float32),
        "fc2_w": w(keys[6], (d_hidden, d_model)),
        "fc2_b": jnp.zeros((d_model,), jnp.float32),
        "ln3_g": jnp.ones((d_model,), jnp.float32),
        "ln3_b": jnp.zeros((d_model,), jnp.float32),
    }


if __name__ == "__main__":
    D_MODEL, D_HIDDEN, NUM_HEADS = 32, 64, 8
    SEQ, BATCH, CTX_SEQ = 8, 2, 12

    key = jax.random.PRNGKey(0)
    k_param, k_in, k_ctx = jax.random.split(key, 3)

    params = init_params(k_param, D_MODEL, D_HIDDEN)
    input_states = jax.random.normal(k_in, (SEQ, BATCH, D_MODEL), dtype=jnp.float32)
    ctx_states = jax.random.normal(k_ctx, (CTX_SEQ, BATCH, D_MODEL), dtype=jnp.float32)
    # mask = 1 for valid tokens, 0 for padding (second batch element has padding).
    mask_input = jnp.ones((BATCH, SEQ), dtype=jnp.int32).at[1, -2:].set(0)
    mask_ctx = jnp.ones((BATCH, CTX_SEQ), dtype=jnp.int32).at[1, -3:].set(0)

    out = condition_att_layer(params, input_states, ctx_states, mask_input, mask_ctx,
                              num_heads=NUM_HEADS)
    out = jax.block_until_ready(out)

    assert out.shape == (SEQ, BATCH, D_MODEL)
    assert bool(jnp.all(jnp.isfinite(out)))

    ref = condition_att_layer_reference(params, input_states, ctx_states, mask_input,
                                        mask_ctx, num_heads=NUM_HEADS)
    max_diff = float(jnp.max(jnp.abs(out - ref)))
    # Tolerance is bounded by default-precision f32->MXU matmul differences between the
    # XLA reference and the Mosaic kernels plus the approx EUP reciprocal; genuine
    # layout/masking bugs produce O(1e-1 .. 1) errors and are still caught.
    assert max_diff < 2e-2, f"mismatch vs reference: {max_diff}"

    print("KERNEL_OK")
</pallas_src>

<mosaic_0001>
module attributes {stable_mosaic.version = 11 : i64} {
  func.func @_linear_kernel(%arg0: i32, %arg1: memref<16x32xf32, #tpu.memory_space<vmem>>, %arg2: memref<32x96xf32, #tpu.memory_space<vmem>>, %arg3: memref<1x96xf32, #tpu.memory_space<vmem>>, %arg4: memref<16x96xf32, #tpu.memory_space<vmem>>) attributes {dimension_semantics = [#tpu.dimension_semantics<parallel>], iteration_bounds = array<i64: 1>, scalar_prefetch = 0 : i64, scratch_operands = 0 : i64, tpu.core_type = #tpu.core_type<tc>, window_params = [{transform_indices = @transform_0, window_bounds = array<i64: 16, 32>}, {pipeline_mode = #tpu.pipeline_mode<synchronous>, transform_indices = @transform_1, window_bounds = array<i64: 32, 96>}, {pipeline_mode = #tpu.pipeline_mode<synchronous>, transform_indices = @transform_2, window_bounds = array<i64: 1, 96>}, {transform_indices = @transform_3, window_bounds = array<i64: 16, 96>}]} {
    %c0 = arith.constant 0 : index
    %c0_0 = arith.constant 0 : index
    %0 = vector.load %arg1[%c0, %c0_0] : memref<16x32xf32, #tpu.memory_space<vmem>>, vector<16x32xf32>
    %c0_1 = arith.constant 0 : index
    %c0_2 = arith.constant 0 : index
    %1 = vector.load %arg2[%c0_1, %c0_2] : memref<32x96xf32, #tpu.memory_space<vmem>>, vector<32x96xf32>
    %cst = arith.constant dense<0.000000e+00> : vector<16x96xf32>
    %2 = tpu.matmul %0, %1, %cst {dimension_numbers = #tpu.dot_dimension_numbers<[1], [0], [0], [1], [0, 0, 1, 1], [], []>} : vector<16x32xf32>, vector<32x96xf32>, vector<16x96xf32> -> vector<16x96xf32>
    %c0_3 = arith.constant 0 : index
    %c0_4 = arith.constant 0 : index
    %3 = vector.load %arg3[%c0_3, %c0_4] : memref<1x96xf32, #tpu.memory_space<vmem>>, vector<1x96xf32>
    %4 = vector.broadcast %3 : vector<1x96xf32> to vector<16x96xf32>
    %5 = arith.addf %2, %4 : vector<16x96xf32>
    %c0_5 = arith.constant 0 : index
    %c0_6 = arith.constant 0 : index
    %6 = vector.load %arg4[%c0_5, %c0_6] : memref<16x96xf32, #tpu.memory_space<vmem>>, vector<16x96xf32>
    tpu.vector_store %arg4[%c0_5, %c0_6], %5 {strides = array<i32>} : memref<16x96xf32, #tpu.memory_space<vmem>>, vector<16x96xf32>,
    return
  }
  func.func @transform_0(%arg0: i32) -> (i32, i32) {
    %c0_i32 = arith.constant 0 : i32
    %c0_i32_0 = arith.constant 0 : i32
    return %arg0, %c0_i32 : i32, i32
  }
  func.func @transform_1(%arg0: i32) -> (i32, i32) {
    %c0_i32 = arith.constant 0 : i32
    %c0_i32_0 = arith.constant 0 : i32
    %c0_i32_1 = arith.constant 0 : i32
    return %c0_i32, %c0_i32_0 : i32, i32
  }
  func.func @transform_2(%arg0: i32) -> (i32, i32) {
    %c0_i32 = arith.constant 0 : i32
    %c0_i32_0 = arith.constant 0 : i32
    %c0_i32_1 = arith.constant 0 : i32
    return %c0_i32, %c0_i32_0 : i32, i32
  }
  func.func @transform_3(%arg0: i32) -> (i32, i32) {
    %c0_i32 = arith.constant 0 : i32
    %c0_i32_0 = arith.constant 0 : i32
    return %arg0, %c0_i32 : i32, i32
  }
}

</mosaic_0001>

<llo_original>
// kernel: tpu_custom_call.1
$region0: #{tpu_custom_call.1}
  #allocation0 [shape = 'u32[]', space=smem, size = 0x4, offset = 0x4, fixed_abs, tag = 'smem constant byte address 0x4 - core index']
  #allocation1 [shape = 'u32[144,128]{1,0:T(1,128)}', space=vmem, size = 0x12000, scoped, tag = 'internal scratch']
  %s0 = inlined_call_operand.hbm [shape: f32[16,32], index: 0, kind: input, shape index: {}]
  %s1 = inlined_call_operand.hbm [shape: f32[32,96], index: 1, kind: input, shape index: {}]
  %s2 = inlined_call_operand.vmem [shape: f32[1,96], index: 2, kind: input, shape index: {}]
  %s3 = inlined_call_operand.hbm [shape: f32[16,96], index: 3, kind: output, shape index: {}]
  %s4 = sld [smem:[#allocation0]]
  $region30: #{tpu_custom_call.1} parent=0
    _
  %s6 = ssub.s32 1, %s4
  %s7 = scalar_select 0, %s6, %s4
  $region1: #{tpu_custom_call.1} parent=0
    #allocation2 [shape = 'u8[8192]{0}', space=vmem, size = 0x2000, scoped, tag = 'input window, operand 0, single buffered']
    #allocation3 [shape = 's32[1]{0}', space=sflag, size = 0x4, scoped, tag = 'scoped memory for tpu_custom_call.1']
    #allocation4 [shape = 's32[1]{0}', space=sflag, size = 0x4, scoped, tag = 'scoped memory for tpu_custom_call.1']
    #allocation5 [shape = 'u8[16384]{0}', space=vmem, size = 0x4000, scoped, tag = 'input window, operand 1, single buffered']
    #allocation6 [shape = 's32[1]{0}', space=sflag, size = 0x4, scoped, tag = 'scoped memory for tpu_custom_call.1']
    #allocation7 [shape = 'u8[8192]{0}', space=vmem, size = 0x2000, scoped, tag = 'output window, operand 0, single buffered']
    %8 = vsyncpa [#allocation3], 0
    %9 = vsyncpa [#allocation6], 0
    %10 = vsyncpa [#allocation4], 0
    // Predicated region
    $region2: #{tpu_custom_call.1} parent=1 // pred_check
      _
    $region3: #{tpu_custom_call.1} parent=1 // pred_check_branch
      %12 = sbr.rel (0) target = $region5
    $region4: #{tpu_custom_call.1} parent=1 // pred_region
      %s14 = ssub.s32 256, 256
      %15 = vsyncadd [#allocation3], %s14
      %s16 = sshll.u32 [#allocation2], 4
      %s17 = int_to_ptr.vmem [resolvable:$true] %s16
      %22 = dma.hbm_to_vmem [thread:$0]  %s0, 256, %s17, [#allocation3], 128, 128, 8
    $region5: #{tpu_custom_call.1} parent=1 // pred_fallthru
      _
    // Predicated region
    $region6: #{tpu_custom_call.1} parent=1 // pred_check
      _
    $region7: #{tpu_custom_call.1} parent=1 // pred_check_branch
      %24 = sbr.rel (0) target = $region9
    $region8: #{tpu_custom_call.1} parent=1 // pred_region
      %s26 = ssub.s32 512, 512
      %27 = vsyncadd [#allocation6], %s26
      %s28 = sshll.u32 [#allocation5], 4
      %s29 = int_to_ptr.vmem [resolvable:$true] %s28
      %34 = dma.hbm_to_vmem [thread:$0]  %s1, 512, %s29, [#allocation6], 128, 128, 8
    $region9: #{tpu_custom_call.1} parent=1 // pred_fallthru
      _
    // Predicated region
    $region10: #{tpu_custom_call.1} parent=1 // pred_check
      _
    $region11: #{tpu_custom_call.1} parent=1 // pred_check_branch
      %36 = sbr.rel (0) target = $region13
    $region12: #{tpu_custom_call.1} parent=1 // pred_region
      _
    $region13: #{tpu_custom_call.1} parent=1 // pred_fallthru
      _
    // Predicated region
    $region14: #{tpu_custom_call.1} parent=1 // pred_check
      _
    $region15: #{tpu_custom_call.1} parent=1 // pred_check_branch
      %38 = sbr.rel (0) target = $region17
    $region16: #{tpu_custom_call.1} parent=1 // pred_region
      %39 = dma.done [#allocation3], 256
    $region17: #{tpu_custom_call.1} parent=1 // pred_fallthru
      _
    // Predicated region
    $region18: #{tpu_custom_call.1} parent=1 // pred_check
      _
    $region19: #{tpu_custom_call.1} parent=1 // pred_check_branch
      %41 = sbr.rel (0) target = $region21
    $region20: #{tpu_custom_call.1} parent=1 // pred_region
      %42 = dma.done [#allocation6], 512
    $region21: #{tpu_custom_call.1} parent=1 // pred_fallthru
      _
    %v43 = vld [vmem:[#allocation2] sm:$0xff]
    %v44 = vld [vmem:[#allocation2 + $0x8] sm:$0xff]
    %v45 = vld [vmem:[#allocation5] sm:$0xff]
    %v46 = vld [vmem:[#allocation5 + $0x8] sm:$0xff]
    %v47 = vld [vmem:[#allocation5 + $0x10] sm:$0xff]
    %v48 = vld [vmem:[#allocation5 + $0x18] sm:$0xff]
    %v49 = vld [vmem:[%s2] sm:$0x1]
    %v51 = vlaneseq
    %v52 = vshrl.u32 %v51, 7
    %v53 = vsub.s32 0, %v52
    %v54 = vrot.slane %v49, %v53
    %vm56 = vcmask 261120
    %v58 = vsel %vm56, %v43, 0
    %v61 = vsel %vm56, %v44, 0
    %63 = vmatprep.subr.mxu0 0.0
    %64 = vmatpush1.msra.mxu0 0.0
    %65 = vmatprep.subr.mxu0 0.0
    %66 = vmatpush1.msra.mxu0 0.0
    %67 = vmatprep.subr.mxu0 0.0
    %68 = vmatpush1.msra.mxu0 0.0
    %69 = vmatprep.subr.mxu0 0.0
    %70 = vmatpush1.msra.mxu0 0.0
    %71 = vmatprep.subr.mxu0 0.0
    %72 = vmatpush1.msra.mxu0 0.0
    %73 = vmatprep.subr.mxu0 0.0
    %74 = vmatpush1.msra.mxu0 0.0
    %75 = vmatprep.subr.mxu0 0.0
    %76 = vmatpush1.msra.mxu0 0.0
    %77 = vmatprep.subr.mxu0 0.0
    %78 = vmatpush1.msra.mxu0 0.0
    %79 = vmatprep.subr.mxu0 0.0
    %80 = vmatpush1.msra.mxu0 0.0
    %81 = vmatprep.subr.mxu0 0.0
    %82 = vmatpush1.msra.mxu0 0.0
    %83 = vmatprep.subr.mxu0 0.0
    %84 = vmatpush1.msra.mxu0 0.0
    %85 = vmatprep.subr.mxu0 0.0
    %86 = vmatpush1.msra.mxu0 0.0
    %87 = vmatprep.subr.mxu0 0.0
    %88 = vmatpush1.msra.mxu0 %v48
    %89 = vmatprep.subr.mxu0 0.0
    %90 = vmatpush1.msra.mxu0 %v47
    %91 = vmatprep.subr.mxu0 0.0
    %92 = vmatpush1.msra.mxu0 %v46
    %93 = vmatprep.subr.mxu0 0.0
    %94 = vmatpush1.msra.mxu0 %v45
    %95 = vmatprep.subr.mxu0 0.0
    %96 = vmatpush2.msra.mxu0 0.0
    %97 = vmatprep.subr.mxu0 0.0
    %98 = vmatpush2.msra.mxu0 0.0
    %99 = vmatprep.subr.mxu0 0.0
    %100 = vmatpush2.msra.mxu0 0.0
    %101 = vmatprep.subr.mxu0 0.0
    %102 = vmatpush2.msra.mxu0 0.0
    %103 = vmatprep.subr.mxu0 0.0
    %104 = vmatpush2.msra.mxu0 0.0
    %105 = vmatprep.subr.mxu0 0.0
    %106 = vmatpush2.msra.mxu0 0.0
    %107 = vmatprep.subr.mxu0 0.0
    %108 = vmatpush2.msra.mxu0 0.0
    %109 = vmatprep.subr.mxu0 0.0
    %110 = vmatpush2.msra.mxu0 0.0
    %111 = vmatprep.subr.mxu0 0.0
    %112 = vmatpush2.msra.mxu0 0.0
    %113 = vmatprep.subr.mxu0 0.0
    %114 = vmatpush2.msra.mxu0 0.0
    %115 = vmatprep.subr.mxu0 0.0
    %116 = vmatpush2.msra.mxu0 0.0
    %117 = vmatprep.subr.mxu0 0.0
    %118 = vmatpush2.msra.mxu0 0.0
    %119 = vmatprep.subr.mxu0 0.0
    %120 = vmatpush2.msra.mxu0 0.0
    %121 = vmatprep.subr.mxu0 0.0
    %122 = vmatpush2.msra.mxu0 0.0
    %123 = vmatprep.subr.mxu0 0.0
    %124 = vmatpush2.msra.mxu0 0.0
    %125 = vmatprep.subr.mxu0 0.0
    %126 = vmatpush2.msra.mxu0 0.0
    %127 = vmatprep.mubr.f32.mxu0 0.0
    %128 = vmatmul.mubr.f32.gmra.mxu0 %v58
    %v129 = vpop.f32.mrf.mxu0
    %v130 = vadd.f32 %v54, %v129
    %v131 = vpop.f32.mrf.mxu0
    %132 = vmatprep.mubr.f32.mxu0 0.0
    %133 = vmatmul.mubr.f32.gmra.mxu0 %v61
    %v134 = vpop.f32.mrf.mxu0
    %v135 = vadd.f32 %v54, %v134
    %v136 = vpop.f32.mrf.mxu0
    %137 = vdwg.mxu0
    %vm138 = vcmask 785408
    %139 = vst.msk [vmem:[#allocation7] sm:$0xff] %vm138, %v130
    %140 = vst.msk [vmem:[#allocation7 + $0x8] sm:$0xff] %vm138, %v135
    // Predicated region
    $region22: #{tpu_custom_call.1} parent=1 // pred_check
      _
    $region23: #{tpu_custom_call.1} parent=1 // pred_check_branch
      %142 = sbr.rel (0) target = $region25
    $region24: #{tpu_custom_call.1} parent=1 // pred_region
      %s144 = ssub.s32 256, 256
      %145 = vsyncadd [#allocation4], %s144
      %s146 = sshll.u32 [#allocation7], 4
      %s147 = int_to_ptr.vmem [resolvable:$true] %s146
      %152 = dma.vmem_to_hbm [thread:$0]  %s147, 256, %s3, [#allocation4], 128, 128, 8
    $region25: #{tpu_custom_call.1} parent=1 // pred_fallthru
      _
    // Predicated region
    $region26: #{tpu_custom_call.1} parent=1 // pred_check
      _
    $region27: #{tpu_custom_call.1} parent=1 // pred_check_branch
      %154 = sbr.rel (0) target = $region29
    $region28: #{tpu_custom_call.1} parent=1 // pred_region
      %155 = dma.done [#allocation4], 256
    $region29: #{tpu_custom_call.1} parent=1 // pred_fallthru
      _
    %156 = vsyncpa [#allocation3], 1
    %157 = vsyncpa [#allocation6], 1
    %158 = vsyncpa [#allocation4], 1

</llo_original>
